<compile_context>
chip_gen: v5e
topology: v5e:2x2
jax: 0.10.0
libtpu: 0.0.40
codegen_flags: <defaults>
</compile_context>

<pallas_src>
import jax
import jax.numpy as jnp
from jax.experimental import pallas as pl
from jax.experimental.pallas import tpu as pltpu


WIDTH = 1024           # packed lane width (multiple of 128) -> wide unmasked stores
SUBLANES = 8
MAX_ROW_TILE = 1024    # 1024 rows x 1024 lanes x 4 B = 4 MiB per block
VMEM_LIMIT = 48 * 1024 * 1024  # 6 live blocks (2 in + 1 out, double-buffered) + headroom


# ------------------------------- Pallas kernel --------------------------------

def _ema_kernel(one_minus_ref, shadow_ref, param_ref, shadow_out_ref):
    om = one_minus_ref[0]                       # f32 scalar from SMEM
    s = shadow_ref[...]
    shadow_out_ref[...] = s - om * (s - param_ref[...])


def ema_update(shadow2d, param2d, one_minus_decay):
    """shadow2d/param2d: [rows, WIDTH] f32 packed buffers. one_minus_decay: [1] f32.
    Returns new shadow (aliased in place with the input shadow under jit+donation)."""
    rows, width = shadow2d.shape
    row_tile = rows if rows <= MAX_ROW_TILE else MAX_ROW_TILE
    assert rows % row_tile == 0, "rows must be padded to a multiple of the row tile"
    grid = (rows // row_tile,)
    return pl.pallas_call(
        _ema_kernel,
        out_shape=jax.ShapeDtypeStruct((rows, width), jnp.float32),
        grid=grid,
        in_specs=[
            pl.BlockSpec(memory_space=pltpu.MemorySpace.SMEM),   # one_minus_decay
            pl.BlockSpec((row_tile, width), lambda i: (i, 0)),   # shadow tile
            pl.BlockSpec((row_tile, width), lambda i: (i, 0)),   # param tile
        ],
        out_specs=pl.BlockSpec((row_tile, width), lambda i: (i, 0)),
        input_output_aliases={1: 0},            # shadow updated in place (under jit+donate)
        compiler_params=pltpu.CompilerParams(
            dimension_semantics=("parallel",),
            vmem_limit_bytes=VMEM_LIMIT),
    )(one_minus_decay, shadow2d, param2d)


# --------------------------- packing / scalar helpers ---------------------------

def _packed_rows(n_elems, width=WIDTH):
    rows = -(-n_elems // width)                          # ceil
    rows = ((rows + SUBLANES - 1) // SUBLANES) * SUBLANES
    if rows > MAX_ROW_TILE:                              # full blocks on every grid step
        rows = ((rows + MAX_ROW_TILE - 1) // MAX_ROW_TILE) * MAX_ROW_TILE
    return rows


def _pack_tree(tree, rows, width):
    """Flatten + concat + zero-pad a param pytree into a lane-dense [rows, width] f32 buffer."""
    leaves = jax.tree_util.tree_leaves(tree)
    flat = jnp.concatenate([l.reshape(-1).astype(jnp.float32) for l in leaves])
    total = rows * width
    flat = jnp.pad(flat, (0, total - flat.shape[0]))
    return flat.reshape(rows, width)


def _decay_and_count(num_updates, decay):
    """LitEma warm-up: returns (one_minus_decay [1]f32, new_num_updates [1]i32)."""
    n = num_updates[0]
    use_n = n >= 0
    n_new = jnp.where(use_n, n + 1, n)
    nf = n_new.astype(jnp.float32)
    warm = (1.0 + nf) / (10.0 + nf)
    d = jnp.where(use_n, jnp.minimum(decay[0], warm), decay[0])
    return (1.0 - d).reshape(1), n_new.reshape(1)


# ------------------------- jitted update paths (donated) ------------------------

def _forward_packed(shadow2d, param2d, num_updates, decay):
    one_minus, n_new = _decay_and_count(num_updates, decay)
    return ema_update(shadow2d, param2d, one_minus), n_new


_forward_packed_jit = jax.jit(_forward_packed, donate_argnums=(0,))


def _forward_tree(shadow2d, params_tree, num_updates, decay):
    rows, width = shadow2d.shape
    param2d = _pack_tree(params_tree, rows, width)       # fused into the same jit
    one_minus, n_new = _decay_and_count(num_updates, decay)
    return ema_update(shadow2d, param2d, one_minus), n_new


_forward_tree_jit = jax.jit(_forward_tree, donate_argnums=(0,))


# --------------------------------- EMA module ----------------------------------

class LitEmaPallas:
    """JAX/Pallas equivalent of LitEma: keeps the shadow copy of all trainable
    params packed into one lane-dense [rows, 1024] f32 buffer and applies the
    EMA update with a single fused, in-place (donated) Pallas kernel."""

    def __init__(self, params, decay=0.9999, use_num_updates=True):
        if decay < 0.0 or decay > 1.0:
            raise ValueError("Decay must be between 0 and 1")
        self.decay = jnp.array([decay], jnp.float32)
        self.num_updates = jnp.array([0 if use_num_updates else -1], jnp.int32)

        leaves, treedef = jax.tree_util.tree_flatten(params)
        self._meta = (treedef, [l.shape for l in leaves], [int(l.size) for l in leaves])
        self._n_elems = sum(self._meta[2])
        self._rows = _packed_rows(self._n_elems)
        self.shadow2d = _pack_tree(params, self._rows, WIDTH)   # shadow <- clone(params)
        self._pack_jit = jax.jit(lambda tree: _pack_tree(tree, self._rows, WIDTH))

    # ---- fast path: train loop keeps params in the packed layout persistently
    def pack_params(self, params):
        return self._pack_jit(params)

    def forward_packed(self, param2d):
        self.shadow2d, self.num_updates = _forward_packed_jit(
            self.shadow2d, param2d, self.num_updates, self.decay)

    # ---- module-compatible path: takes the param pytree; pack fused into same jit
    def forward(self, params):
        self.shadow2d, self.num_updates = _forward_tree_jit(
            self.shadow2d, params, self.num_updates, self.decay)

    def shadow_params(self):
        treedef, shapes, sizes = self._meta
        flat = self.shadow2d.reshape(-1)[: self._n_elems]
        leaves, off = [], 0
        for shp, sz in zip(shapes, sizes):
            leaves.append(flat[off:off + sz].reshape(shp))
            off += sz
        return jax.tree_util.tree_unflatten(treedef, leaves)

    def copy_to(self):
        # TODO(synk): copy_to/store/restore are host-side buffer copies (no kernel work).
        return self.shadow_params()


# --------------------------------- reference ------------------------------------

def ema_reference(shadow_tree, param_tree, num_updates, decay):
    n = int(num_updates)
    d = float(decay)
    if n >= 0:
        n = n + 1
        d = min(d, (1.0 + n) / (10.0 + n))
    one_minus = 1.0 - d
    new_shadow = jax.tree_util.tree_map(
        lambda s, p: s - one_minus * (s - p), shadow_tree, param_tree)
    return new_shadow, n


# ------------------------------------ main ---------------------------------------

if __name__ == "__main__":
    key = jax.random.PRNGKey(0)
    k_init, k_steps = jax.random.split(key)

    # Tiny synthetic "model" whose trainable params get EMA'd.
    shapes = {"w1": (32, 128), "b1": (128,),
              "w2": (128, 64), "b2": (64,),
              "w3": (64, 32),  "b3": (32,)}
    init_keys = jax.random.split(k_init, len(shapes))
    params = {name: 0.02 * jax.random.normal(k, shp, jnp.float32)
              for (name, shp), k in zip(shapes.items(), init_keys)}

    ema = LitEmaPallas(params, decay=0.9999, use_num_updates=True)

    # Pure-JAX reference state tracked alongside.
    ref_shadow = jax.tree_util.tree_map(lambda x: x, params)
    ref_n = 0

    ok = True
    for step in range(3):
        # Simulate a training step changing the live parameters.
        k_steps, k_upd = jax.random.split(k_steps)
        upd_keys = jax.random.split(k_upd, len(shapes))
        params = {name: p - 0.01 * jax.random.normal(k, p.shape, jnp.float32)
                  for (name, p), k in zip(params.items(), upd_keys)}

        ref_shadow, ref_n = ema_reference(ref_shadow, params, ref_n,
                                          float(ema.decay[0]))

        if step < 2:
            ema.forward(params)                      # pytree path (pack fused into jit)
        else:
            ema.forward_packed(ema.pack_params(params))   # packed fast path

        got = ema.shadow_params()
        for name in shapes:
            ok &= bool(jnp.allclose(got[name], ref_shadow[name],
                                    atol=1e-5, rtol=1e-5))
        ok &= int(ema.num_updates[0]) == ref_n

    jax.block_until_ready(ema.shadow2d)
    assert ok and bool(jnp.all(jnp.isfinite(ema.shadow2d)))
    print("KERNEL_OK")
</pallas_src>

<mosaic_0001>
module attributes {stable_mosaic.version = 11 : i64} {
  func.func @_ema_kernel(%arg0: i32, %arg1: memref<1xf32, #tpu.memory_space<smem>>, %arg2: memref<16x1024xf32, #tpu.memory_space<vmem>>, %arg3: memref<16x1024xf32, #tpu.memory_space<vmem>>, %arg4: memref<16x1024xf32, #tpu.memory_space<vmem>>) attributes {dimension_semantics = [#tpu.dimension_semantics<parallel>], iteration_bounds = array<i64: 1>, scalar_prefetch = 0 : i64, scratch_operands = 0 : i64, tpu.core_type = #tpu.core_type<tc>, window_params = [{transform_indices = @transform_0, window_bounds = array<i64: 1>}, {transform_indices = @transform_1, window_bounds = array<i64: 16, 1024>}, {transform_indices = @transform_2, window_bounds = array<i64: 16, 1024>}, {transform_indices = @transform_3, window_bounds = array<i64: 16, 1024>}]} {
    %c0 = arith.constant 0 : index
    %0 = memref.load %arg1[%c0] : memref<1xf32, #tpu.memory_space<smem>>
    %c0_0 = arith.constant 0 : index
    %c0_1 = arith.constant 0 : index
    %1 = vector.load %arg2[%c0_0, %c0_1] : memref<16x1024xf32, #tpu.memory_space<vmem>>, vector<16x1024xf32>
    %c0_2 = arith.constant 0 : index
    %c0_3 = arith.constant 0 : index
    %2 = vector.load %arg3[%c0_2, %c0_3] : memref<16x1024xf32, #tpu.memory_space<vmem>>, vector<16x1024xf32>
    %3 = arith.subf %1, %2 : vector<16x1024xf32>
    %4 = vector.broadcast %0 : f32 to vector<16x1024xf32>
    %5 = arith.mulf %4, %3 : vector<16x1024xf32>
    %6 = arith.subf %1, %5 : vector<16x1024xf32>
    %c0_4 = arith.constant 0 : index
    %c0_5 = arith.constant 0 : index
    %7 = vector.load %arg4[%c0_4, %c0_5] : memref<16x1024xf32, #tpu.memory_space<vmem>>, vector<16x1024xf32>
    tpu.vector_store %arg4[%c0_4, %c0_5], %6 {strides = array<i32>} : memref<16x1024xf32, #tpu.memory_space<vmem>>, vector<16x1024xf32>,
    return
  }
  func.func @transform_0(%arg0: i32) -> i32 {
    %c0_i32 = arith.constant 0 : i32
    %c0_i32_0 = arith.constant 0 : i32
    return %c0_i32 : i32
  }
  func.func @transform_1(%arg0: i32) -> (i32, i32) {
    %c0_i32 = arith.constant 0 : i32
    %c0_i32_0 = arith.constant 0 : i32
    return %arg0, %c0_i32 : i32, i32
  }
  func.func @transform_2(%arg0: i32) -> (i32, i32) {
    %c0_i32 = arith.constant 0 : i32
    %c0_i32_0 = arith.constant 0 : i32
    return %arg0, %c0_i32 : i32, i32
  }
  func.func @transform_3(%arg0: i32) -> (i32, i32) {
    %c0_i32 = arith.constant 0 : i32
    %c0_i32_0 = arith.constant 0 : i32
    return %arg0, %c0_i32 : i32, i32
  }
}

</mosaic_0001>

<llo_original>
// kernel: _forward_tree.1
$region0: #{_forward_tree.1}
  #allocation0 [shape = 'u32[]', space=smem, size = 0x4, offset = 0x4, fixed_abs, tag = 'smem constant byte address 0x4 - core index']
  #allocation1 [shape = 'u32[72,128]{1,0:T(1,128)}', space=vmem, size = 0x9000, scoped, tag = 'internal scratch']
  #allocation2 [shape = 'f32[1]{0:T(128)S(6)}', space=smem, size = 0x200, scoped, tag = 'scoped memory for _forward_tree.1']
  %s0 = inlined_call_operand.<no memory space> [shape: f32[1], index: 0, kind: input, shape index: {}]
  %s1 = inlined_call_operand.vmem [shape: f32[16,1024], index: 1, kind: input, shape index: {}, may-alias: {1,3}]
  %s2 = inlined_call_operand.vmem [shape: f32[16,1024], index: 2, kind: input, shape index: {}]
  %s3 = inlined_call_operand.vmem [shape: f32[16,1024], index: 3, kind: output, shape index: {}, may-alias: {1,3}]
  %s4 = sld [smem:[#allocation0]]
  $region22: #{_forward_tree.1} parent=0
    _
  %s6 = ssub.s32 1, %s4
  %s7 = scalar_select 0, %s6, %s4
  %8 = sst [smem:[#allocation2]] %s0
  // Predicated region
  $region2: #{_forward_tree.1} parent=0 // pred_check
    _
  $region3: #{_forward_tree.1} parent=0 // pred_check_branch
    %10 = sbr.rel (0) target = $region5
  $region4: #{_forward_tree.1} parent=0 // pred_region
    _
  $region5: #{_forward_tree.1} parent=0 // pred_fallthru
    _
  // Predicated region
  $region6: #{_forward_tree.1} parent=0 // pred_check
    _
  $region7: #{_forward_tree.1} parent=0 // pred_check_branch
    %12 = sbr.rel (0) target = $region9
  $region8: #{_forward_tree.1} parent=0 // pred_region
    _
  $region9: #{_forward_tree.1} parent=0 // pred_fallthru
    _
  // Predicated region
  $region10: #{_forward_tree.1} parent=0 // pred_check
    _
  $region11: #{_forward_tree.1} parent=0 // pred_check_branch
    %14 = sbr.rel (0) target = $region13
  $region12: #{_forward_tree.1} parent=0 // pred_region
    _
  $region13: #{_forward_tree.1} parent=0 // pred_fallthru
    _
  %s15 = sld [smem:[#allocation2]]
  %v16 = vld [vmem:[%s1] sm:$0xff]
  %v17 = vld [vmem:[%s1 + $0x8] sm:$0xff]
  %v18 = vld [vmem:[%s1 + $0x10] sm:$0xff]
  %v19 = vld [vmem:[%s1 + $0x18] sm:$0xff]
  %v20 = vld [vmem:[%s1 + $0x20] sm:$0xff]
  %v21 = vld [vmem:[%s1 + $0x28] sm:$0xff]
  %v22 = vld [vmem:[%s1 + $0x30] sm:$0xff]
  %v23 = vld [vmem:[%s1 + $0x38] sm:$0xff]
  %v24 = vld [vmem:[%s1 + $0x40] sm:$0xff]
  %v25 = vld [vmem:[%s1 + $0x48] sm:$0xff]
  %v26 = vld [vmem:[%s1 + $0x50] sm:$0xff]
  %v27 = vld [vmem:[%s1 + $0x58] sm:$0xff]
  %v28 = vld [vmem:[%s1 + $0x60] sm:$0xff]
  %v29 = vld [vmem:[%s1 + $0x68] sm:$0xff]
  %v30 = vld [vmem:[%s1 + $0x70] sm:$0xff]
  %v31 = vld [vmem:[%s1 + $0x78] sm:$0xff]
  %v32 = vld [vmem:[%s2] sm:$0xff]
  %v33 = vld [vmem:[%s2 + $0x8] sm:$0xff]
  %v34 = vld [vmem:[%s2 + $0x10] sm:$0xff]
  %v35 = vld [vmem:[%s2 + $0x18] sm:$0xff]
  %v36 = vld [vmem:[%s2 + $0x20] sm:$0xff]
  %v37 = vld [vmem:[%s2 + $0x28] sm:$0xff]
  %v38 = vld [vmem:[%s2 + $0x30] sm:$0xff]
  %v39 = vld [vmem:[%s2 + $0x38] sm:$0xff]
  %v40 = vld [vmem:[%s2 + $0x40] sm:$0xff]
  %v41 = vld [vmem:[%s2 + $0x48] sm:$0xff]
  %v42 = vld [vmem:[%s2 + $0x50] sm:$0xff]
  %v43 = vld [vmem:[%s2 + $0x58] sm:$0xff]
  %v44 = vld [vmem:[%s2 + $0x60] sm:$0xff]
  %v45 = vld [vmem:[%s2 + $0x68] sm:$0xff]
  %v46 = vld [vmem:[%s2 + $0x70] sm:$0xff]
  %v47 = vld [vmem:[%s2 + $0x78] sm:$0xff]
  %v48 = vsub.f32 %v16, %v32
  %v49 = vsub.f32 %v17, %v33
  %v50 = vsub.f32 %v18, %v34
  %v51 = vsub.f32 %v19, %v35
  %v52 = vsub.f32 %v20, %v36
  %v53 = vsub.f32 %v21, %v37
  %v54 = vsub.f32 %v22, %v38
  %v55 = vsub.f32 %v23, %v39
  %v56 = vsub.f32 %v24, %v40
  %v57 = vsub.f32 %v25, %v41
  %v58 = vsub.f32 %v26, %v42
  %v59 = vsub.f32 %v27, %v43
  %v60 = vsub.f32 %v28, %v44
  %v61 = vsub.f32 %v29, %v45
  %v62 = vsub.f32 %v30, %v46
  %v63 = vsub.f32 %v31, %v47
  %v64 = vstv %s15
  %v65 = vmul.f32 %v64, %v48
  %v66 = vmul.f32 %v64, %v49
  %v67 = vmul.f32 %v64, %v50
  %v68 = vmul.f32 %v64, %v51
  %v69 = vmul.f32 %v64, %v52
  %v70 = vmul.f32 %v64, %v53
  %v71 = vmul.f32 %v64, %v54
  %v72 = vmul.f32 %v64, %v55
  %v73 = vmul.f32 %v64, %v56
  %v74 = vmul.f32 %v64, %v57
  %v75 = vmul.f32 %v64, %v58
  %v76 = vmul.f32 %v64, %v59
  %v77 = vmul.f32 %v64, %v60
  %v78 = vmul.f32 %v64, %v61
  %v79 = vmul.f32 %v64, %v62
  %v80 = vmul.f32 %v64, %v63
  %v81 = vsub.f32 %v16, %v65
  %v82 = vsub.f32 %v17, %v66
  %v83 = vsub.f32 %v18, %v67
  %v84 = vsub.f32 %v19, %v68
  %v85 = vsub.f32 %v20, %v69
  %v86 = vsub.f32 %v21, %v70
  %v87 = vsub.f32 %v22, %v71
  %v88 = vsub.f32 %v23, %v72
  %v89 = vsub.f32 %v24, %v73
  %v90 = vsub.f32 %v25, %v74
  %v91 = vsub.f32 %v26, %v75
  %v92 = vsub.f32 %v27, %v76
  %v93 = vsub.f32 %v28, %v77
  %v94 = vsub.f32 %v29, %v78
  %v95 = vsub.f32 %v30, %v79
  %v96 = vsub.f32 %v31, %v80
  %97 = vst [vmem:[%s3] sm:$0xff] %v81
  %98 = vst [vmem:[%s3 + $0x8] sm:$0xff] %v82
  %99 = vst [vmem:[%s3 + $0x10] sm:$0xff] %v83
  %100 = vst [vmem:[%s3 + $0x18] sm:$0xff] %v84
  %101 = vst [vmem:[%s3 + $0x20] sm:$0xff] %v85
  %102 = vst [vmem:[%s3 + $0x28] sm:$0xff] %v86
  %103 = vst [vmem:[%s3 + $0x30] sm:$0xff] %v87
  %104 = vst [vmem:[%s3 + $0x38] sm:$0xff] %v88
  %105 = vst [vmem:[%s3 + $0x40] sm:$0xff] %v89
  %106 = vst [vmem:[%s3 + $0x48] sm:$0xff] %v90
  %107 = vst [vmem:[%s3 + $0x50] sm:$0xff] %v91
  %108 = vst [vmem:[%s3 + $0x58] sm:$0xff] %v92
  %109 = vst [vmem:[%s3 + $0x60] sm:$0xff] %v93
  %110 = vst [vmem:[%s3 + $0x68] sm:$0xff] %v94
  %111 = vst [vmem:[%s3 + $0x70] sm:$0xff] %v95
  %112 = vst [vmem:[%s3 + $0x78] sm:$0xff] %v96
  // Predicated region
  $region14: #{_forward_tree.1} parent=0 // pred_check
    _
  $region15: #{_forward_tree.1} parent=0 // pred_check_branch
    %114 = sbr.rel (0) target = $region17
  $region16: #{_forward_tree.1} parent=0 // pred_region
    _
  $region17: #{_forward_tree.1} parent=0 // pred_fallthru
    _
  // Predicated region
  $region18: #{_forward_tree.1} parent=0 // pred_check
    _
  $region19: #{_forward_tree.1} parent=0 // pred_check_branch
    %116 = sbr.rel (0) target = $region21
  $region20: #{_forward_tree.1} parent=0 // pred_region
    _
  $region21: #{_forward_tree.1} parent=0 // pred_fallthru
    _

</llo_original>
